<compile_context>
chip_gen: v7x
topology: tpu7x:2x2x1
jax: 0.10.0
libtpu: 0.0.40
codegen_flags: <defaults>
</compile_context>

<pallas_src>
import functools

import jax
import jax.numpy as jnp
from jax.experimental import pallas as pl
from jax.experimental.pallas import tpu as pltpu


# ---------------------------------------------------------------------------
# Deterministic color-conversion matrices (XYZ D50 -> linear RGB), matching
# utils_color.xyz2linearrgb_weight(ColorSpace, is_forward=True).
# ---------------------------------------------------------------------------
def xyz2linearrgb_weight(color_space: int = 0):
    if color_space == 0:      # linear sRGB (D65), Bradford-adapted from D50
        return (( 3.1338561, -1.6168667, -0.4906146),
                (-0.9787684,  1.9161415,  0.0334540),
                ( 0.0719453, -0.2289914,  1.4052427))
    if color_space == 1:      # linear Adobe RGB (D65), Bradford-adapted from D50
        return (( 1.9624274, -0.6105343, -0.3413404),
                (-0.9787684,  1.9161415,  0.0334540),
                ( 0.0286869, -0.1406752,  1.3487655))
    if color_space == 2:      # linear ProPhoto RGB (D50)
        return (( 1.3459433, -0.2556075, -0.0511118),
                (-0.5445989,  1.5081673,  0.0205351),
                ( 0.0000000,  0.0000000,  1.2118128))
    raise ValueError(f"unsupported ColorSpace={color_space}")


# ---------------------------------------------------------------------------
# Kernel factory: bake the 3x3 constants; 9 broadcast MACs on the VPU over
# dense (rows, 128) channel slabs.
# ---------------------------------------------------------------------------
def _make_kernel(w):
    (w00, w01, w02), (w10, w11, w12), (w20, w21, w22) = [
        tuple(float(v) for v in row) for row in w]

    def kernel(x_ref, o_ref):
        # Block is (1, 3, rows, 128); each channel is a dense (rows, 128) slab.
        # Read channels directly off the ref (no full-block materialization)
        # and force f32 math (weights are Python floats -> weak-typed).
        x0 = x_ref[0, 0].astype(jnp.float32)
        x1 = x_ref[0, 1].astype(jnp.float32)
        x2 = x_ref[0, 2].astype(jnp.float32)
        o_ref[0, 0] = (w00 * x0 + w01 * x1 + w02 * x2).astype(o_ref.dtype)
        o_ref[0, 1] = (w10 * x0 + w11 * x1 + w12 * x2).astype(o_ref.dtype)
        o_ref[0, 2] = (w20 * x0 + w21 * x1 + w22 * x2).astype(o_ref.dtype)

    return kernel


def _round_up(a: int, b: int) -> int:
    return (a + b - 1) // b * b


# ---------------------------------------------------------------------------
# Wrapper: dense (N, 3, HW/128, 128) view, spatial tiling, no pad/crop unless
# H*W is not a multiple of 128.
# ---------------------------------------------------------------------------
@functools.partial(jax.jit, static_argnames=("color_space", "max_tile_px"))
def xyz2linear_rgb(x: jnp.ndarray, color_space: int = 0,
                   max_tile_px: int = 262144) -> jnp.ndarray:
    """x: (N, 3, H, W) float32. Returns (N, 3, H, W) linear RGB (same dtype)."""
    n, c, h, w = x.shape
    assert c == 3, "XYZ input must have 3 channels"
    hw = h * w
    hw_p = _round_up(hw, 128)

    x_flat = x.reshape(n, c, hw)
    if hw_p != hw:
        # Only needed when H*W is not a multiple of the 128-lane width: the
        # dense (rows, 128) view requires an exact reshape.  Common image
        # sizes hit the pad-free path.
        x_flat = jnp.pad(x_flat, ((0, 0), (0, 0), (0, hw_p - hw)))

    rows_total = hw_p // 128
    x_dense = x_flat.reshape(n, c, rows_total, 128)   # free (row-major view)

    # Spatial rows per grid step (multiple of 8 unless it equals the full
    # extent).  Default ~256K px/step -> ~3 MiB in + 3 MiB out per block.
    max_rows = max(8, (max_tile_px // 128) // 8 * 8)
    if rows_total <= max_rows:
        rows, num_tiles = rows_total, 1
    else:
        rows = max_rows
        num_tiles = pl.cdiv(rows_total, rows)         # ragged last block is OK

    # v7x: keep >= 2 parallel grid steps once the problem is non-trivial so
    # both TensorCores get work (both grid axes are "parallel").
    if n * num_tiles < 2 and rows_total * 128 > 131072:
        rows = max(8, _round_up((rows_total + 1) // 2, 8))
        num_tiles = pl.cdiv(rows_total, rows)

    kernel = _make_kernel(xyz2linearrgb_weight(color_space))
    block = (1, c, rows, 128)
    index_map = lambda i, j: (i, 0, j, 0)

    out_dense = pl.pallas_call(
        kernel,
        out_shape=jax.ShapeDtypeStruct((n, c, rows_total, 128), x.dtype),
        grid_spec=pltpu.PrefetchScalarGridSpec(
            num_scalar_prefetch=0,
            grid=(n, num_tiles),
            in_specs=[pl.BlockSpec(block, index_map)],
            out_specs=pl.BlockSpec(block, index_map),
        ),
        compiler_params=pltpu.CompilerParams(
            dimension_semantics=("parallel", "parallel"),
            vmem_limit_bytes=32 * 1024 * 1024,
        ),
    )(x_dense)

    out_flat = out_dense.reshape(n, c, hw_p)
    if hw_p != hw:
        out_flat = out_flat[:, :, :hw]
    return out_flat.reshape(n, c, h, w)


if __name__ == "__main__":
    key = jax.random.PRNGKey(0)
    w_mat = jnp.asarray(xyz2linearrgb_weight(0), dtype=jnp.float32)

    def ref_fn(xx):
        return jnp.einsum("oc,nchw->nohw", w_mat, xx,
                          precision=jax.lax.Precision.HIGHEST)

    # 1) Small image, H*W multiple of 128 -> pad/crop-free dense path.
    x = jax.random.uniform(key, (2, 3, 16, 16), dtype=jnp.float32)
    out = jax.block_until_ready(xyz2linear_rgb(x, color_space=0))
    assert out.shape == x.shape
    assert jnp.allclose(out, ref_fn(x), atol=1e-5, rtol=1e-5)

    # 2) Ragged H*W (not a multiple of 128) -> pad + crop path.
    x2 = jax.random.uniform(jax.random.PRNGKey(1), (2, 3, 16, 15),
                            dtype=jnp.float32)
    out2 = jax.block_until_ready(xyz2linear_rgb(x2, color_space=0))
    assert jnp.allclose(out2, ref_fn(x2), atol=1e-5, rtol=1e-5)

    # 3) Streaming path: force multiple spatial tiles with a ragged last
    #    block (rows_total=13, rows=8, 2 grid steps).
    x3 = jax.random.uniform(jax.random.PRNGKey(2), (1, 3, 40, 40),
                            dtype=jnp.float32)
    out3 = jax.block_until_ready(
        xyz2linear_rgb(x3, color_space=0, max_tile_px=1024))
    assert jnp.allclose(out3, ref_fn(x3), atol=1e-5, rtol=1e-5)

    # TODO(synk): the module's reverse() (inverse 3x3 conv) is not implemented;
    # it would be the same kernel with the inverted matrix baked in.
    print("KERNEL_OK")
</pallas_src>

<mosaic_0001>
module attributes {stable_mosaic.version = 11 : i64} {
  func.func @kernel(%arg0: i32, %arg1: i32, %arg2: memref<1x3x2x128xf32, #tpu.memory_space<vmem>>, %arg3: memref<1x3x2x128xf32, #tpu.memory_space<vmem>>) attributes {dimension_semantics = [#tpu.dimension_semantics<parallel>, #tpu.dimension_semantics<parallel>], iteration_bounds = array<i64: 2, 1>, scalar_prefetch = 0 : i64, scratch_operands = 0 : i64, tpu.core_type = #tpu.core_type<tc>, window_params = [{transform_indices = @transform_0, window_bounds = array<i64: 1, 3, 2, 128>}, {transform_indices = @transform_1, window_bounds = array<i64: 1, 3, 2, 128>}]} {
    %c0 = arith.constant 0 : index
    %c0_0 = arith.constant 0 : index
    %c0_1 = arith.constant 0 : index
    %c0_2 = arith.constant 0 : index
    %0 = vector.load %arg2[%c0, %c0_0, %c0_1, %c0_2] : memref<1x3x2x128xf32, #tpu.memory_space<vmem>>, vector<1x1x2x128xf32>
    %1 = vector.shape_cast %0 : vector<1x1x2x128xf32> to vector<2x128xf32>
    %c0_3 = arith.constant 0 : index
    %c1 = arith.constant 1 : index
    %c0_4 = arith.constant 0 : index
    %c0_5 = arith.constant 0 : index
    %2 = vector.load %arg2[%c0_3, %c1, %c0_4, %c0_5] : memref<1x3x2x128xf32, #tpu.memory_space<vmem>>, vector<1x1x2x128xf32>
    %3 = vector.shape_cast %2 : vector<1x1x2x128xf32> to vector<2x128xf32>
    %c0_6 = arith.constant 0 : index
    %c2 = arith.constant 2 : index
    %c0_7 = arith.constant 0 : index
    %c0_8 = arith.constant 0 : index
    %4 = vector.load %arg2[%c0_6, %c2, %c0_7, %c0_8] : memref<1x3x2x128xf32, #tpu.memory_space<vmem>>, vector<1x1x2x128xf32>
    %5 = vector.shape_cast %4 : vector<1x1x2x128xf32> to vector<2x128xf32>
    %cst = arith.constant 3.13385606 : f32
    %6 = vector.broadcast %cst : f32 to vector<2x128xf32>
    %7 = arith.mulf %6, %1 : vector<2x128xf32>
    %cst_9 = arith.constant -1.61686671 : f32
    %8 = vector.broadcast %cst_9 : f32 to vector<2x128xf32>
    %9 = arith.mulf %8, %3 : vector<2x128xf32>
    %10 = arith.addf %7, %9 : vector<2x128xf32>
    %cst_10 = arith.constant -0.490614593 : f32
    %11 = vector.broadcast %cst_10 : f32 to vector<2x128xf32>
    %12 = arith.mulf %11, %5 : vector<2x128xf32>
    %13 = arith.addf %10, %12 : vector<2x128xf32>
    %c0_11 = arith.constant 0 : index
    %c0_12 = arith.constant 0 : index
    %c0_13 = arith.constant 0 : index
    %c0_14 = arith.constant 0 : index
    %14 = vector.load %arg3[%c0_11, %c0_12, %c0_13, %c0_14] : memref<1x3x2x128xf32, #tpu.memory_space<vmem>>, vector<1x1x2x128xf32>
    %15 = vector.shape_cast %14 : vector<1x1x2x128xf32> to vector<2x128xf32>
    %16 = vector.shape_cast %13 : vector<2x128xf32> to vector<1x1x2x128xf32>
    tpu.vector_store %arg3[%c0_11, %c0_12, %c0_13, %c0_14], %16 {strides = array<i32>} : memref<1x3x2x128xf32, #tpu.memory_space<vmem>>, vector<1x1x2x128xf32>,
    %cst_15 = arith.constant -0.978768408 : f32
    %17 = vector.broadcast %cst_15 : f32 to vector<2x128xf32>
    %18 = arith.mulf %17, %1 : vector<2x128xf32>
    %cst_16 = arith.constant 1.91614151 : f32
    %19 = vector.broadcast %cst_16 : f32 to vector<2x128xf32>
    %20 = arith.mulf %19, %3 : vector<2x128xf32>
    %21 = arith.addf %18, %20 : vector<2x128xf32>
    %cst_17 = arith.constant 3.345400e-02 : f32
    %22 = vector.broadcast %cst_17 : f32 to vector<2x128xf32>
    %23 = arith.mulf %22, %5 : vector<2x128xf32>
    %24 = arith.addf %21, %23 : vector<2x128xf32>
    %c0_18 = arith.constant 0 : index
    %c1_19 = arith.constant 1 : index
    %c0_20 = arith.constant 0 : index
    %c0_21 = arith.constant 0 : index
    %25 = vector.load %arg3[%c0_18, %c1_19, %c0_20, %c0_21] : memref<1x3x2x128xf32, #tpu.memory_space<vmem>>, vector<1x1x2x128xf32>
    %26 = vector.shape_cast %25 : vector<1x1x2x128xf32> to vector<2x128xf32>
    %27 = vector.shape_cast %24 : vector<2x128xf32> to vector<1x1x2x128xf32>
    tpu.vector_store %arg3[%c0_18, %c1_19, %c0_20, %c0_21], %27 {strides = array<i32>} : memref<1x3x2x128xf32, #tpu.memory_space<vmem>>, vector<1x1x2x128xf32>,
    %cst_22 = arith.constant 7.194530e-02 : f32
    %28 = vector.broadcast %cst_22 : f32 to vector<2x128xf32>
    %29 = arith.mulf %28, %1 : vector<2x128xf32>
    %cst_23 = arith.constant -0.228991404 : f32
    %30 = vector.broadcast %cst_23 : f32 to vector<2x128xf32>
    %31 = arith.mulf %30, %3 : vector<2x128xf32>
    %32 = arith.addf %29, %31 : vector<2x128xf32>
    %cst_24 = arith.constant 1.40524268 : f32
    %33 = vector.broadcast %cst_24 : f32 to vector<2x128xf32>
    %34 = arith.mulf %33, %5 : vector<2x128xf32>
    %35 = arith.addf %32, %34 : vector<2x128xf32>
    %c0_25 = arith.constant 0 : index
    %c2_26 = arith.constant 2 : index
    %c0_27 = arith.constant 0 : index
    %c0_28 = arith.constant 0 : index
    %36 = vector.load %arg3[%c0_25, %c2_26, %c0_27, %c0_28] : memref<1x3x2x128xf32, #tpu.memory_space<vmem>>, vector<1x1x2x128xf32>
    %37 = vector.shape_cast %36 : vector<1x1x2x128xf32> to vector<2x128xf32>
    %38 = vector.shape_cast %35 : vector<2x128xf32> to vector<1x1x2x128xf32>
    tpu.vector_store %arg3[%c0_25, %c2_26, %c0_27, %c0_28], %38 {strides = array<i32>} : memref<1x3x2x128xf32, #tpu.memory_space<vmem>>, vector<1x1x2x128xf32>,
    return
  }
  func.func @transform_0(%arg0: i32, %arg1: i32) -> (i32, i32, i32, i32) {
    %c0_i32 = arith.constant 0 : i32
    %c0_i32_0 = arith.constant 0 : i32
    %c0_i32_1 = arith.constant 0 : i32
    return %arg0, %c0_i32, %arg1, %c0_i32_0 : i32, i32, i32, i32
  }
  func.func @transform_1(%arg0: i32, %arg1: i32) -> (i32, i32, i32, i32) {
    %c0_i32 = arith.constant 0 : i32
    %c0_i32_0 = arith.constant 0 : i32
    %c0_i32_1 = arith.constant 0 : i32
    return %arg0, %c0_i32, %arg1, %c0_i32_0 : i32, i32, i32, i32
  }
}

</mosaic_0001>

<llo_original>
// kernel: xyz2linear_rgb.1
$region0: #{xyz2linear_rgb.1}
  #allocation0 [shape = 'u32[]', space=smem, size = 0x4, offset = 0x4, fixed_abs, tag = 'smem constant byte address 0x4 - core index']
  #allocation1 [shape = 'u32[144,128]{1,0:T(1,128)}', space=vmem, size = 0x12000, scoped, tag = 'internal scratch']
  %s0 = inlined_call_operand.vmem [shape: f32[2,3,2,128], index: 0, kind: input, shape index: {}]
  %s1 = inlined_call_operand.vmem [shape: f32[2,3,2,128], index: 1, kind: output, shape index: {}]
  %s2 = sld [smem:[#allocation0]]
  $region37: #{xyz2linear_rgb.1} parent=0
    _
  %s4 = ssub.s32 1, %s2
  %s5 = scalar_select 0, %s4, %s2
  loop: start=0, step=1, limit=4
  $region2: #{xyz2linear_rgb.1} parent=0 // loop_pre_header
    _
  $region3: #{xyz2linear_rgb.1} parent=0 // loop_header
    %s7 = sphi 0, %s11
    %p8 = scmp.ge.s32.totalorder %s7, 4
    %s14 = sphi 0, %s26
    %s15 = sphi 0, %s22
    %s16 = sphi 0, %s14
    %s17 = sphi 0, %s15
    %s18 = sphi 0, %s16
    %s19 = sphi 0, %s17
    %s31 = sphi 0, %s33
    %s34 = sphi 0, %s31
    %s35 = sphi 0, %s34
    %s51 = sphi 0, %s35
    %s59 = sphi 0, %s61
    %s62 = sphi 0, %s59
    %s63 = sphi 0, %s62
    %s79 = sphi 0, %s63
  $region4: #{xyz2linear_rgb.1} parent=0 // loop_header_branch
    %10 = sbr.rel (%p8) target = $region8
  $region5: #{xyz2linear_rgb.1} parent=0 // loop_body
    %s12 = ssub.s32 %s7, 1
    %s13 = ssub.s32 %s7, 2
    %s20 = sadd.s32 1, %s15
    %p21 = scmp.ge.s32.totalorder %s20, 1
    %s22 = scalar_select %p21, 0, %s20
    %s23 = sadd.s32 1, %s14
    %s24 = scalar_select %p21, %s23, %s14
    %p25 = scmp.ge.s32.totalorder %s24, 2
    %s26 = scalar_select %p25, 0, %s24
    %s27 = ssub.s32 %s14, %s26
    %s28 = ssub.s32 %s15, %s22
    %s29 = sor.u32 %s27, %s28
    %p30 = scmp.eq.s32.totalorder %s29, 0
    %s32 = sadd.s32 %s31, 1
    %s33 = scalar_select %p30, %s31, %s32
    %p36 = pneg %p30
    %p37 = scmp.eq.s32.totalorder %s7, 1
    %p38 = por %p36, %p37
    %p39 = scmp.ne.s32.totalorder %s31, %s34
    %p40 = scmp.eq.s32.totalorder %s7, 0
    %p41 = por %p39, %p40
    %p42 = scmp.ne.s32.totalorder %s31, %s34
    %p43 = scmp.eq.s32.totalorder %s12, 1
    %p44 = por %p42, %p43
    %p45 = scmp.ne.s32.totalorder %s34, %s35
    %p46 = scmp.eq.s32.totalorder %s12, 0
    %p47 = por %p45, %p46
    %p48 = scmp.ne.s32.totalorder %s34, %s35
    %p49 = scmp.eq.s32.totalorder %s13, 1
    %p50 = por %p48, %p49
    %p52 = scmp.ne.s32.totalorder %s35, %s51
    %p53 = scmp.eq.s32.totalorder %s13, 0
    %p54 = por %p52, %p53
    %s55 = ssub.s32 %s14, %s26
    %s56 = ssub.s32 %s15, %s22
    %s57 = sor.u32 %s55, %s56
    %p58 = scmp.eq.s32.totalorder %s57, 0
    %s60 = sadd.s32 %s59, 1
    %s61 = scalar_select %p58, %s59, %s60
    %p64 = pneg %p58
    %p65 = scmp.eq.s32.totalorder %s7, 1
    %p66 = por %p64, %p65
    %p67 = scmp.ne.s32.totalorder %s59, %s62
    %p68 = scmp.eq.s32.totalorder %s7, 0
    %p69 = por %p67, %p68
    %p70 = scmp.ne.s32.totalorder %s59, %s62
    %p71 = scmp.eq.s32.totalorder %s12, 1
    %p72 = por %p70, %p71
    %p73 = scmp.ne.s32.totalorder %s62, %s63
    %p74 = scmp.eq.s32.totalorder %s12, 0
    %p75 = por %p73, %p74
    %p76 = scmp.ne.s32.totalorder %s62, %s63
    %p77 = scmp.eq.s32.totalorder %s13, 1
    %p78 = por %p76, %p77
    %p80 = scmp.ne.s32.totalorder %s63, %s79
    %p81 = scmp.eq.s32.totalorder %s13, 0
    %p82 = por %p80, %p81
    %p83 = scmp.le.s32.totalorder 1, %s7
    %p84 = scmp.lt.s32.totalorder %s7, 3
    %p85 = pnand %p83, %p84
    %p86 = pneg %p85
    // Predicated region
    $region9: #{xyz2linear_rgb.1} parent=5 // pred_check
      _
    $region10: #{xyz2linear_rgb.1} parent=5 // pred_check_branch
      %88 = sbr.rel (%p85) target = $region12
    $region11: #{xyz2linear_rgb.1} parent=5 // pred_region
      %s89 = ssub.s32 %s7, 1
    $region12: #{xyz2linear_rgb.1} parent=5 // pred_fallthru
      _
    %p90 = scmp.lt.s32.totalorder %s7, 2
    // Predicated region
    $region13: #{xyz2linear_rgb.1} parent=5 // pred_check
      %p91 = pneg %p90
    $region14: #{xyz2linear_rgb.1} parent=5 // pred_check_branch
      %93 = sbr.rel (%p91) target = $region16
    $region15: #{xyz2linear_rgb.1} parent=5 // pred_region
      // Predicated region
      $region17: #{xyz2linear_rgb.1} parent=15 // pred_check
        %p94 = pneg %p41
      $region18: #{xyz2linear_rgb.1} parent=15 // pred_check_branch
        %96 = sbr.rel (%p94) target = $region20
      $region19: #{xyz2linear_rgb.1} parent=15 // pred_region
        %p97 = scmp.lt.s32.totalorder %s14, 1
        %s98 = scalar_select %p97, %s14, 1
        %p99 = scmp.lt.s32.totalorder %s15, 0
        %s100 = scalar_select %p99, %s15, 0
        %s101 = smul.addr %s98, 3
        %s102 = sadd.s32 %s100, %s101
        %s103 = smul.addr %s102, 2
        %s104 = scalar_lea.vmem %s0, %s103
      $region20: #{xyz2linear_rgb.1} parent=15 // pred_fallthru
        _
    $region16: #{xyz2linear_rgb.1} parent=5 // pred_fallthru
      _
    %p105 = scmp.le.s32.totalorder 1, %s7
    %p106 = scmp.lt.s32.totalorder %s7, 3
    %p107 = pnand %p105, %p106
    %p108 = pneg %p107
    // Predicated region
    $region21: #{xyz2linear_rgb.1} parent=5 // pred_check
      _
    $region22: #{xyz2linear_rgb.1} parent=5 // pred_check_branch
      %110 = sbr.rel (%p107) target = $region24
    $region23: #{xyz2linear_rgb.1} parent=5 // pred_region
      %s111 = ssub.s32 %s7, 1
      %p112 = scmp.lt.s32.totalorder %s16, 1
      %s113 = scalar_select %p112, %s16, 1
      %p114 = scmp.lt.s32.totalorder %s17, 0
      %s115 = scalar_select %p114, %s17, 0
      %s116 = smul.addr %s113, 3
      %s117 = sadd.s32 %s115, %s116
      %s118 = smul.addr %s117, 2
      %s119 = scalar_lea.vmem %s0, %s118
      %p120 = pneg %p47
      %p121 = pneg %p44
      %p122 = pneg %p75
      %p123 = pneg %p72
      %p124 = scmp.lt.s32.totalorder %s16, 1
      %s125 = scalar_select %p124, %s16, 1
      %p126 = scmp.lt.s32.totalorder %s17, 0
      %s127 = scalar_select %p126, %s17, 0
      %s128 = smul.addr %s125, 3
      %s129 = sadd.s32 %s127, %s128
      %s130 = smul.addr %s129, 2
      %s131 = scalar_lea.vmem %s1, %s130
      %p132 = scmp.lt.s32.totalorder %s16, 1
      %s133 = scalar_select %p132, %s16, 1
      %p134 = scmp.lt.s32.totalorder %s17, 0
      %s135 = scalar_select %p134, %s17, 0
      %s136 = smul.addr %s133, 3
      %s137 = sadd.s32 %s135, %s136
      %s138 = smul.addr %s137, 2
      %s139 = scalar_lea.vmem %s0, %s138
      %p140 = scmp.lt.s32.totalorder %s16, 1
      %s141 = scalar_select %p140, %s16, 1
      %p142 = scmp.lt.s32.totalorder %s17, 0
      %s143 = scalar_select %p142, %s17, 0
      %s144 = smul.addr %s141, 3
      %s145 = sadd.s32 %s143, %s144
      %s146 = smul.addr %s145, 2
      %s147 = scalar_lea.vmem %s1, %s146
      %v148 = vld [vmem:[%s139] sm:$0x3]
      %s149 = scalar_lea.vmem %s139, 2
      %v150 = vld [vmem:[%s149] sm:$0x3]
      %s151 = scalar_lea.vmem %s139, 4
      %v152 = vld [vmem:[%s151] sm:$0x3]
      %v153 = vmul.f32 %v148, 3.133856
      %v154 = vmul.f32 %v150, -1.6168667
      %v155 = vadd.f32 %v153, %v154
      %v156 = vmul.f32 %v152, -0.4906146
      %v157 = vadd.f32 %v155, %v156
      %158 = vst [vmem:[%s147] sm:$0x3] %v157
      %v159 = vmul.f32 %v148, -0.9787684
      %v160 = vmul.f32 %v150, 1.9161415
      %v161 = vadd.f32 %v159, %v160
      %v162 = vmul.f32 %v152, 0.033454
      %v163 = vadd.f32 %v161, %v162
      %s164 = scalar_lea.vmem %s147, 2
      %165 = vst [vmem:[%s164] sm:$0x3] %v163
      %v166 = vmul.f32 %v148, 0.0719453
      %v167 = vmul.f32 %v150, -0.2289914
      %v168 = vadd.f32 %v166, %v167
      %v169 = vmul.f32 %v152, 1.4052427
      %v170 = vadd.f32 %v168, %v169
      %s171 = scalar_lea.vmem %s147, 4
      %172 = vst [vmem:[%s171] sm:$0x3] %v170
      %p173 = scmp.lt.s32.totalorder %s16, 1
      %s174 = scalar_select %p173, %s16, 1
      %p175 = scmp.lt.s32.totalorder %s17, 0
      %s176 = scalar_select %p175, %s17, 0
      %s177 = smul.addr %s174, 3
      %s178 = sadd.s32 %s176, %s177
      %s179 = smul.addr %s178, 2
      %s180 = scalar_lea.vmem %s1, %s179
      // Predicated region
      $region25: #{xyz2linear_rgb.1} parent=23 // pred_check
        %p181 = pneg %p72
      $region26: #{xyz2linear_rgb.1} parent=23 // pred_check_branch
        %183 = sbr.rel (%p181) target = $region28
      $region27: #{xyz2linear_rgb.1} parent=23 // pred_region
        _
      $region28: #{xyz2linear_rgb.1} parent=23 // pred_fallthru
        _
    $region24: #{xyz2linear_rgb.1} parent=5 // pred_fallthru
      _
    %p184 = scmp.le.s32.totalorder 2, %s7
    // Predicated region
    $region29: #{xyz2linear_rgb.1} parent=5 // pred_check
      %p185 = pneg %p184
    $region30: #{xyz2linear_rgb.1} parent=5 // pred_check_branch
      %187 = sbr.rel (%p185) target = $region32
    $region31: #{xyz2linear_rgb.1} parent=5 // pred_region
      %s188 = ssub.s32 %s7, 2
      // Predicated region
      $region33: #{xyz2linear_rgb.1} parent=31 // pred_check
        %p189 = pneg %p78
      $region34: #{xyz2linear_rgb.1} parent=31 // pred_check_branch
        %191 = sbr.rel (%p189) target = $region36
      $region35: #{xyz2linear_rgb.1} parent=31 // pred_region
        %p192 = scmp.lt.s32.totalorder %s18, 1
        %s193 = scalar_select %p192, %s18, 1
        %p194 = scmp.lt.s32.totalorder %s19, 0
        %s195 = scalar_select %p194, %s19, 0
        %s196 = smul.addr %s193, 3
        %s197 = sadd.s32 %s195, %s196
        %s198 = smul.addr %s197, 2
        %s199 = scalar_lea.vmem %s1, %s198
      $region36: #{xyz2linear_rgb.1} parent=31 // pred_fallthru
        _
    $region32: #{xyz2linear_rgb.1} parent=5 // pred_fallthru
      _
  $region6: #{xyz2linear_rgb.1} parent=0 // loop_footer
    %s11 = sadd.s32 1, %s7
  $region7: #{xyz2linear_rgb.1} parent=0 // loop_footer_branch
    %6 = sbr.rel target = $region3
  $region8: #{xyz2linear_rgb.1} parent=0 // loop_exit
    _

</llo_original>
